<compile_context>
chip_gen: v5e
topology: v5e:2x2
jax: 0.10.0
libtpu: 0.0.40
codegen_flags: <defaults>
</compile_context>

<pallas_src>
import jax
import jax.numpy as jnp
from jax.experimental import pallas as pl
from jax.experimental.pallas import tpu as pltpu

EPS = 1e-5
C = 3  # module is hard-wired to 3 channels

# offsets inside the packed SMEM parameter vector (36 floats total)
_W1, _W2 = 0, 9
_G1, _BE1, _G2, _BE2, _G3, _BE3 = 18, 21, 24, 27, 30, 33


def advanced_model_kernel(p_ref, x_ref, o_ref):
    """p_ref: SMEM f32[36] packed params.  x_ref/o_ref: VMEM f32[N, 3, HW]."""

    # Per-channel slabs, each (N, HW) -- lane-dense (HW is a multiple of 128).
    x = [x_ref[:, k, :] for k in range(C)]

    def conv1x1(chs, wbase):
        # y[o] = sum_k w[o, k] * x[k]   (9 scalar-broadcast FMAs, VPU only)
        out = []
        for o in range(C):
            acc = p_ref[wbase + 3 * o + 0] * chs[0]
            acc = acc + p_ref[wbase + 3 * o + 1] * chs[1]
            acc = acc + p_ref[wbase + 3 * o + 2] * chs[2]
            out.append(acc)
        return out

    def bn(chs, gbase, bbase):
        # training-mode batch norm, single-pass stats + fused affine
        out = []
        for c in range(C):
            y = chs[c]
            mean = jnp.mean(y, axis=(0, 1), keepdims=True)          # (1, 1)
            mean_sq = jnp.mean(y * y, axis=(0, 1), keepdims=True)   # (1, 1)
            var = mean_sq - mean * mean                              # biased var
            scale = p_ref[gbase + c] * jax.lax.rsqrt(var + EPS)
            shift = p_ref[bbase + c] - mean * scale
            out.append(y * scale + shift)                            # one FMA/elem
        return out

    def relu(chs):
        return [jnp.maximum(y, 0.0) for y in chs]

    y = conv1x1(x, _W1)           # conv1 (bias cancels under training-mode BN)
    y = relu(bn(y, _G1, _BE1))    # bn1 + relu1
    y = conv1x1(y, _W2)           # conv2 (bias cancels under training-mode BN)
    y = relu(bn(y, _G2, _BE2))    # bn2 + relu2
    y = bn(y, _G3, _BE3)          # bn3 (see TODO in header)

    for c in range(C):
        o_ref[:, c, :] = y[c]


def advanced_model_forward(x_nchw, params):
    """x_nchw: (N, 3, H, W) float32 -> flat (N*3*H*W,) float32."""
    N, Cin, H, W = x_nchw.shape
    assert Cin == C, f"module expects {C} channels, got {Cin}"
    HW = H * W

    # NCHW-native: contiguous reshape only, no transpose.
    x3 = x_nchw.reshape(N, C, HW)

    # Pack all small parameters into one flat f32[36] vector (lands in SMEM).
    packed = jnp.concatenate([
        params["w1"].reshape(-1), params["w2"].reshape(-1),
        params["g1"].reshape(-1), params["be1"].reshape(-1),
        params["g2"].reshape(-1), params["be2"].reshape(-1),
        params["g3"].reshape(-1), params["be3"].reshape(-1),
    ]).astype(jnp.float32)

    out3 = pl.pallas_call(
        advanced_model_kernel,
        out_shape=jax.ShapeDtypeStruct((N, C, HW), jnp.float32),
        in_specs=[
            pl.BlockSpec(memory_space=pltpu.MemorySpace.SMEM),   # packed params
            pl.BlockSpec(memory_space=pltpu.MemorySpace.VMEM),   # activations
        ],
        out_specs=pl.BlockSpec(memory_space=pltpu.MemorySpace.VMEM),
    )(packed, x3)

    # Same element order as torch.reshape(x, [-1]) on the NCHW tensor.
    return out3.reshape(-1)


def init_params(key):
    """Deterministic synthetic parameters matching the module's shapes."""
    ks = jax.random.split(key, 10)
    return {
        # Conv2d(3, 3, k=1): weight (out, in), bias (1, out).
        # Note: b1/b2 are mathematical no-ops before training-mode BN (the batch
        # mean absorbs them), so the kernel does not consume them.
        "w1": 0.3 * jax.random.normal(ks[0], (3, 3), jnp.float32),
        "b1": 0.1 * jax.random.normal(ks[1], (1, 3), jnp.float32),
        "w2": 0.3 * jax.random.normal(ks[2], (3, 3), jnp.float32),
        "b2": 0.1 * jax.random.normal(ks[3], (1, 3), jnp.float32),
        # BatchNorm2d(3) affine params (gamma, beta)
        "g1": 1.0 + 0.1 * jax.random.normal(ks[4], (1, 3), jnp.float32),
        "be1": 0.1 * jax.random.normal(ks[5], (1, 3), jnp.float32),
        "g2": 1.0 + 0.1 * jax.random.normal(ks[6], (1, 3), jnp.float32),
        "be2": 0.1 * jax.random.normal(ks[7], (1, 3), jnp.float32),
        "g3": 1.0 + 0.1 * jax.random.normal(ks[8], (1, 3), jnp.float32),
        "be3": 0.1 * jax.random.normal(ks[9], (1, 3), jnp.float32),
    }


if __name__ == "__main__":
    key = jax.random.PRNGKey(0)
    k_x, k_p = jax.random.split(key)

    # Small input consistent with the module: (batch=2, channels=3, 16x16)
    x = jax.random.normal(k_x, (2, 3, 16, 16), jnp.float32)
    params = init_params(k_p)

    out = jax.jit(advanced_model_forward)(x, params)
    out = jax.block_until_ready(out)

    assert out.shape == (2 * 3 * 16 * 16,), out.shape
    assert jnp.all(jnp.isfinite(out)), "non-finite values in output"
    print("KERNEL_OK")
</pallas_src>

<mosaic_0001>
module attributes {stable_mosaic.version = 11 : i64} {
  func.func @advanced_model_kernel(%arg0: memref<36xf32, #tpu.memory_space<smem>>, %arg1: memref<2x3x256xf32, #tpu.memory_space<vmem>>, %arg2: memref<2x3x256xf32, #tpu.memory_space<vmem>>) attributes {dimension_semantics = [], scalar_prefetch = 0 : i64, scratch_operands = 0 : i64, tpu.core_type = #tpu.core_type<tc>} {
    %c0 = arith.constant 0 : index
    %c0_0 = arith.constant 0 : index
    %c0_1 = arith.constant 0 : index
    %0 = vector.load %arg1[%c0, %c0_0, %c0_1] : memref<2x3x256xf32, #tpu.memory_space<vmem>>, vector<2x1x256xf32>
    %1 = vector.shape_cast %0 : vector<2x1x256xf32> to vector<2x256xf32>
    %c0_2 = arith.constant 0 : index
    %c1 = arith.constant 1 : index
    %c0_3 = arith.constant 0 : index
    %2 = vector.load %arg1[%c0_2, %c1, %c0_3] : memref<2x3x256xf32, #tpu.memory_space<vmem>>, vector<2x1x256xf32>
    %3 = vector.shape_cast %2 : vector<2x1x256xf32> to vector<2x256xf32>
    %c0_4 = arith.constant 0 : index
    %c2 = arith.constant 2 : index
    %c0_5 = arith.constant 0 : index
    %4 = vector.load %arg1[%c0_4, %c2, %c0_5] : memref<2x3x256xf32, #tpu.memory_space<vmem>>, vector<2x1x256xf32>
    %5 = vector.shape_cast %4 : vector<2x1x256xf32> to vector<2x256xf32>
    %c0_6 = arith.constant 0 : index
    %6 = memref.load %arg0[%c0_6] : memref<36xf32, #tpu.memory_space<smem>>
    %7 = vector.broadcast %6 : f32 to vector<2x256xf32>
    %8 = arith.mulf %7, %1 : vector<2x256xf32>
    %c1_7 = arith.constant 1 : index
    %9 = memref.load %arg0[%c1_7] : memref<36xf32, #tpu.memory_space<smem>>
    %10 = vector.broadcast %9 : f32 to vector<2x256xf32>
    %11 = arith.mulf %10, %3 : vector<2x256xf32>
    %12 = arith.addf %8, %11 : vector<2x256xf32>
    %c2_8 = arith.constant 2 : index
    %13 = memref.load %arg0[%c2_8] : memref<36xf32, #tpu.memory_space<smem>>
    %14 = vector.broadcast %13 : f32 to vector<2x256xf32>
    %15 = arith.mulf %14, %5 : vector<2x256xf32>
    %16 = arith.addf %12, %15 : vector<2x256xf32>
    %c3 = arith.constant 3 : index
    %17 = memref.load %arg0[%c3] : memref<36xf32, #tpu.memory_space<smem>>
    %18 = vector.broadcast %17 : f32 to vector<2x256xf32>
    %19 = arith.mulf %18, %1 : vector<2x256xf32>
    %c4 = arith.constant 4 : index
    %20 = memref.load %arg0[%c4] : memref<36xf32, #tpu.memory_space<smem>>
    %21 = vector.broadcast %20 : f32 to vector<2x256xf32>
    %22 = arith.mulf %21, %3 : vector<2x256xf32>
    %23 = arith.addf %19, %22 : vector<2x256xf32>
    %c5 = arith.constant 5 : index
    %24 = memref.load %arg0[%c5] : memref<36xf32, #tpu.memory_space<smem>>
    %25 = vector.broadcast %24 : f32 to vector<2x256xf32>
    %26 = arith.mulf %25, %5 : vector<2x256xf32>
    %27 = arith.addf %23, %26 : vector<2x256xf32>
    %c6 = arith.constant 6 : index
    %28 = memref.load %arg0[%c6] : memref<36xf32, #tpu.memory_space<smem>>
    %29 = vector.broadcast %28 : f32 to vector<2x256xf32>
    %30 = arith.mulf %29, %1 : vector<2x256xf32>
    %c7 = arith.constant 7 : index
    %31 = memref.load %arg0[%c7] : memref<36xf32, #tpu.memory_space<smem>>
    %32 = vector.broadcast %31 : f32 to vector<2x256xf32>
    %33 = arith.mulf %32, %3 : vector<2x256xf32>
    %34 = arith.addf %30, %33 : vector<2x256xf32>
    %c8 = arith.constant 8 : index
    %35 = memref.load %arg0[%c8] : memref<36xf32, #tpu.memory_space<smem>>
    %36 = vector.broadcast %35 : f32 to vector<2x256xf32>
    %37 = arith.mulf %36, %5 : vector<2x256xf32>
    %38 = arith.addf %34, %37 : vector<2x256xf32>
    %39 = vector.shape_cast %16 : vector<2x256xf32> to vector<1x2x256xf32>
    %cst = arith.constant dense<0.000000e+00> : vector<1xf32>
    %40 = vector.multi_reduction <add>, %39, %cst [1, 2] : vector<1x2x256xf32> to vector<1xf32>
    %41 = vector.shape_cast %40 : vector<1xf32> to vector<1x1x1xf32>
    %42 = vector.extract %41[0, 0, 0] : f32 from vector<1x1x1xf32>
    %43 = vector.broadcast %42 : f32 to vector<1x1xf32>
    %cst_9 = arith.constant 5.120000e+02 : f32
    %44 = vector.broadcast %cst_9 : f32 to vector<1x1xf32>
    %45 = arith.divf %43, %44 : vector<1x1xf32>
    %46 = arith.mulf %16, %16 : vector<2x256xf32>
    %47 = vector.shape_cast %46 : vector<2x256xf32> to vector<1x2x256xf32>
    %cst_10 = arith.constant dense<0.000000e+00> : vector<1xf32>
    %48 = vector.multi_reduction <add>, %47, %cst_10 [1, 2] : vector<1x2x256xf32> to vector<1xf32>
    %49 = vector.shape_cast %48 : vector<1xf32> to vector<1x1x1xf32>
    %50 = vector.extract %49[0, 0, 0] : f32 from vector<1x1x1xf32>
    %51 = vector.broadcast %50 : f32 to vector<1x1xf32>
    %cst_11 = arith.constant 5.120000e+02 : f32
    %52 = vector.broadcast %cst_11 : f32 to vector<1x1xf32>
    %53 = arith.divf %51, %52 : vector<1x1xf32>
    %54 = arith.mulf %45, %45 : vector<1x1xf32>
    %55 = arith.subf %53, %54 : vector<1x1xf32>
    %c18 = arith.constant 18 : index
    %56 = memref.load %arg0[%c18] : memref<36xf32, #tpu.memory_space<smem>>
    %cst_12 = arith.constant 9.99999974E-6 : f32
    %57 = vector.broadcast %cst_12 : f32 to vector<1x1xf32>
    %58 = arith.addf %55, %57 : vector<1x1xf32>
    %59 = math.rsqrt %58 : vector<1x1xf32>
    %60 = vector.broadcast %56 : f32 to vector<1x1xf32>
    %61 = arith.mulf %60, %59 : vector<1x1xf32>
    %c21 = arith.constant 21 : index
    %62 = memref.load %arg0[%c21] : memref<36xf32, #tpu.memory_space<smem>>
    %63 = arith.mulf %45, %61 : vector<1x1xf32>
    %64 = vector.broadcast %62 : f32 to vector<1x1xf32>
    %65 = arith.subf %64, %63 : vector<1x1xf32>
    %66 = vector.broadcast %61 : vector<1x1xf32> to vector<2x256xf32>
    %67 = arith.mulf %16, %66 : vector<2x256xf32>
    %68 = vector.broadcast %65 : vector<1x1xf32> to vector<2x256xf32>
    %69 = arith.addf %67, %68 : vector<2x256xf32>
    %70 = vector.shape_cast %27 : vector<2x256xf32> to vector<1x2x256xf32>
    %cst_13 = arith.constant dense<0.000000e+00> : vector<1xf32>
    %71 = vector.multi_reduction <add>, %70, %cst_13 [1, 2] : vector<1x2x256xf32> to vector<1xf32>
    %72 = vector.shape_cast %71 : vector<1xf32> to vector<1x1x1xf32>
    %73 = vector.extract %72[0, 0, 0] : f32 from vector<1x1x1xf32>
    %74 = vector.broadcast %73 : f32 to vector<1x1xf32>
    %cst_14 = arith.constant 5.120000e+02 : f32
    %75 = vector.broadcast %cst_14 : f32 to vector<1x1xf32>
    %76 = arith.divf %74, %75 : vector<1x1xf32>
    %77 = arith.mulf %27, %27 : vector<2x256xf32>
    %78 = vector.shape_cast %77 : vector<2x256xf32> to vector<1x2x256xf32>
    %cst_15 = arith.constant dense<0.000000e+00> : vector<1xf32>
    %79 = vector.multi_reduction <add>, %78, %cst_15 [1, 2] : vector<1x2x256xf32> to vector<1xf32>
    %80 = vector.shape_cast %79 : vector<1xf32> to vector<1x1x1xf32>
    %81 = vector.extract %80[0, 0, 0] : f32 from vector<1x1x1xf32>
    %82 = vector.broadcast %81 : f32 to vector<1x1xf32>
    %cst_16 = arith.constant 5.120000e+02 : f32
    %83 = vector.broadcast %cst_16 : f32 to vector<1x1xf32>
    %84 = arith.divf %82, %83 : vector<1x1xf32>
    %85 = arith.mulf %76, %76 : vector<1x1xf32>
    %86 = arith.subf %84, %85 : vector<1x1xf32>
    %c19 = arith.constant 19 : index
    %87 = memref.load %arg0[%c19] : memref<36xf32, #tpu.memory_space<smem>>
    %cst_17 = arith.constant 9.99999974E-6 : f32
    %88 = vector.broadcast %cst_17 : f32 to vector<1x1xf32>
    %89 = arith.addf %86, %88 : vector<1x1xf32>
    %90 = math.rsqrt %89 : vector<1x1xf32>
    %91 = vector.broadcast %87 : f32 to vector<1x1xf32>
    %92 = arith.mulf %91, %90 : vector<1x1xf32>
    %c22 = arith.constant 22 : index
    %93 = memref.load %arg0[%c22] : memref<36xf32, #tpu.memory_space<smem>>
    %94 = arith.mulf %76, %92 : vector<1x1xf32>
    %95 = vector.broadcast %93 : f32 to vector<1x1xf32>
    %96 = arith.subf %95, %94 : vector<1x1xf32>
    %97 = vector.broadcast %92 : vector<1x1xf32> to vector<2x256xf32>
    %98 = arith.mulf %27, %97 : vector<2x256xf32>
    %99 = vector.broadcast %96 : vector<1x1xf32> to vector<2x256xf32>
    %100 = arith.addf %98, %99 : vector<2x256xf32>
    %101 = vector.shape_cast %38 : vector<2x256xf32> to vector<1x2x256xf32>
    %cst_18 = arith.constant dense<0.000000e+00> : vector<1xf32>
    %102 = vector.multi_reduction <add>, %101, %cst_18 [1, 2] : vector<1x2x256xf32> to vector<1xf32>
    %103 = vector.shape_cast %102 : vector<1xf32> to vector<1x1x1xf32>
    %104 = vector.extract %103[0, 0, 0] : f32 from vector<1x1x1xf32>
    %105 = vector.broadcast %104 : f32 to vector<1x1xf32>
    %cst_19 = arith.constant 5.120000e+02 : f32
    %106 = vector.broadcast %cst_19 : f32 to vector<1x1xf32>
    %107 = arith.divf %105, %106 : vector<1x1xf32>
    %108 = arith.mulf %38, %38 : vector<2x256xf32>
    %109 = vector.shape_cast %108 : vector<2x256xf32> to vector<1x2x256xf32>
    %cst_20 = arith.constant dense<0.000000e+00> : vector<1xf32>
    %110 = vector.multi_reduction <add>, %109, %cst_20 [1, 2] : vector<1x2x256xf32> to vector<1xf32>
    %111 = vector.shape_cast %110 : vector<1xf32> to vector<1x1x1xf32>
    %112 = vector.extract %111[0, 0, 0] : f32 from vector<1x1x1xf32>
    %113 = vector.broadcast %112 : f32 to vector<1x1xf32>
    %cst_21 = arith.constant 5.120000e+02 : f32
    %114 = vector.broadcast %cst_21 : f32 to vector<1x1xf32>
    %115 = arith.divf %113, %114 : vector<1x1xf32>
    %116 = arith.mulf %107, %107 : vector<1x1xf32>
    %117 = arith.subf %115, %116 : vector<1x1xf32>
    %c20 = arith.constant 20 : index
    %118 = memref.load %arg0[%c20] : memref<36xf32, #tpu.memory_space<smem>>
    %cst_22 = arith.constant 9.99999974E-6 : f32
    %119 = vector.broadcast %cst_22 : f32 to vector<1x1xf32>
    %120 = arith.addf %117, %119 : vector<1x1xf32>
    %121 = math.rsqrt %120 : vector<1x1xf32>
    %122 = vector.broadcast %118 : f32 to vector<1x1xf32>
    %123 = arith.mulf %122, %121 : vector<1x1xf32>
    %c23 = arith.constant 23 : index
    %124 = memref.load %arg0[%c23] : memref<36xf32, #tpu.memory_space<smem>>
    %125 = arith.mulf %107, %123 : vector<1x1xf32>
    %126 = vector.broadcast %124 : f32 to vector<1x1xf32>
    %127 = arith.subf %126, %125 : vector<1x1xf32>
    %128 = vector.broadcast %123 : vector<1x1xf32> to vector<2x256xf32>
    %129 = arith.mulf %38, %128 : vector<2x256xf32>
    %130 = vector.broadcast %127 : vector<1x1xf32> to vector<2x256xf32>
    %131 = arith.addf %129, %130 : vector<2x256xf32>
    %cst_23 = arith.constant 0.000000e+00 : f32
    %132 = vector.broadcast %cst_23 : f32 to vector<2x256xf32>
    %133 = arith.maximumf %69, %132 : vector<2x256xf32>
    %cst_24 = arith.constant 0.000000e+00 : f32
    %134 = vector.broadcast %cst_24 : f32 to vector<2x256xf32>
    %135 = arith.maximumf %100, %134 : vector<2x256xf32>
    %cst_25 = arith.constant 0.000000e+00 : f32
    %136 = vector.broadcast %cst_25 : f32 to vector<2x256xf32>
    %137 = arith.maximumf %131, %136 : vector<2x256xf32>
    %c9 = arith.constant 9 : index
    %138 = memref.load %arg0[%c9] : memref<36xf32, #tpu.memory_space<smem>>
    %139 = vector.broadcast %138 : f32 to vector<2x256xf32>
    %140 = arith.mulf %139, %133 : vector<2x256xf32>
    %c10 = arith.constant 10 : index
    %141 = memref.load %arg0[%c10] : memref<36xf32, #tpu.memory_space<smem>>
    %142 = vector.broadcast %141 : f32 to vector<2x256xf32>
    %143 = arith.mulf %142, %135 : vector<2x256xf32>
    %144 = arith.addf %140, %143 : vector<2x256xf32>
    %c11 = arith.constant 11 : index
    %145 = memref.load %arg0[%c11] : memref<36xf32, #tpu.memory_space<smem>>
    %146 = vector.broadcast %145 : f32 to vector<2x256xf32>
    %147 = arith.mulf %146, %137 : vector<2x256xf32>
    %148 = arith.addf %144, %147 : vector<2x256xf32>
    %c12 = arith.constant 12 : index
    %149 = memref.load %arg0[%c12] : memref<36xf32, #tpu.memory_space<smem>>
    %150 = vector.broadcast %149 : f32 to vector<2x256xf32>
    %151 = arith.mulf %150, %133 : vector<2x256xf32>
    %c13 = arith.constant 13 : index
    %152 = memref.load %arg0[%c13] : memref<36xf32, #tpu.memory_space<smem>>
    %153 = vector.broadcast %152 : f32 to vector<2x256xf32>
    %154 = arith.mulf %153, %135 : vector<2x256xf32>
    %155 = arith.addf %151, %154 : vector<2x256xf32>
    %c14 = arith.constant 14 : index
    %156 = memref.load %arg0[%c14] : memref<36xf32, #tpu.memory_space<smem>>
    %157 = vector.broadcast %156 : f32 to vector<2x256xf32>
    %158 = arith.mulf %157, %137 : vector<2x256xf32>
    %159 = arith.addf %155, %158 : vector<2x256xf32>
    %c15 = arith.constant 15 : index
    %160 = memref.load %arg0[%c15] : memref<36xf32, #tpu.memory_space<smem>>
    %161 = vector.broadcast %160 : f32 to vector<2x256xf32>
    %162 = arith.mulf %161, %133 : vector<2x256xf32>
    %c16 = arith.constant 16 : index
    %163 = memref.load %arg0[%c16] : memref<36xf32, #tpu.memory_space<smem>>
    %164 = vector.broadcast %163 : f32 to vector<2x256xf32>
    %165 = arith.mulf %164, %135 : vector<2x256xf32>
    %166 = arith.addf %162, %165 : vector<2x256xf32>
    %c17 = arith.constant 17 : index
    %167 = memref.load %arg0[%c17] : memref<36xf32, #tpu.memory_space<smem>>
    %168 = vector.broadcast %167 : f32 to vector<2x256xf32>
    %169 = arith.mulf %168, %137 : vector<2x256xf32>
    %170 = arith.addf %166, %169 : vector<2x256xf32>
    %171 = vector.shape_cast %148 : vector<2x256xf32> to vector<1x2x256xf32>
    %cst_26 = arith.constant dense<0.000000e+00> : vector<1xf32>
    %172 = vector.multi_reduction <add>, %171, %cst_26 [1, 2] : vector<1x2x256xf32> to vector<1xf32>
    %173 = vector.shape_cast %172 : vector<1xf32> to vector<1x1x1xf32>
    %174 = vector.extract %173[0, 0, 0] : f32 from vector<1x1x1xf32>
    %175 = vector.broadcast %174 : f32 to vector<1x1xf32>
    %cst_27 = arith.constant 5.120000e+02 : f32
    %176 = vector.broadcast %cst_27 : f32 to vector<1x1xf32>
    %177 = arith.divf %175, %176 : vector<1x1xf32>
    %178 = arith.mulf %148, %148 : vector<2x256xf32>
    %179 = vector.shape_cast %178 : vector<2x256xf32> to vector<1x2x256xf32>
    %cst_28 = arith.constant dense<0.000000e+00> : vector<1xf32>
    %180 = vector.multi_reduction <add>, %179, %cst_28 [1, 2] : vector<1x2x256xf32> to vector<1xf32>
    %181 = vector.shape_cast %180 : vector<1xf32> to vector<1x1x1xf32>
    %182 = vector.extract %181[0, 0, 0] : f32 from vector<1x1x1xf32>
    %183 = vector.broadcast %182 : f32 to vector<1x1xf32>
    %cst_29 = arith.constant 5.120000e+02 : f32
    %184 = vector.broadcast %cst_29 : f32 to vector<1x1xf32>
    %185 = arith.divf %183, %184 : vector<1x1xf32>
    %186 = arith.mulf %177, %177 : vector<1x1xf32>
    %187 = arith.subf %185, %186 : vector<1x1xf32>
    %c24 = arith.constant 24 : index
    %188 = memref.load %arg0[%c24] : memref<36xf32, #tpu.memory_space<smem>>
    %cst_30 = arith.constant 9.99999974E-6 : f32
    %189 = vector.broadcast %cst_30 : f32 to vector<1x1xf32>
    %190 = arith.addf %187, %189 : vector<1x1xf32>
    %191 = math.rsqrt %190 : vector<1x1xf32>
    %192 = vector.broadcast %188 : f32 to vector<1x1xf32>
    %193 = arith.mulf %192, %191 : vector<1x1xf32>
    %c27 = arith.constant 27 : index
    %194 = memref.load %arg0[%c27] : memref<36xf32, #tpu.memory_space<smem>>
    %195 = arith.mulf %177, %193 : vector<1x1xf32>
    %196 = vector.broadcast %194 : f32 to vector<1x1xf32>
    %197 = arith.subf %196, %195 : vector<1x1xf32>
    %198 = vector.broadcast %193 : vector<1x1xf32> to vector<2x256xf32>
    %199 = arith.mulf %148, %198 : vector<2x256xf32>
    %200 = vector.broadcast %197 : vector<1x1xf32> to vector<2x256xf32>
    %201 = arith.addf %199, %200 : vector<2x256xf32>
    %202 = vector.shape_cast %159 : vector<2x256xf32> to vector<1x2x256xf32>
    %cst_31 = arith.constant dense<0.000000e+00> : vector<1xf32>
    %203 = vector.multi_reduction <add>, %202, %cst_31 [1, 2] : vector<1x2x256xf32> to vector<1xf32>
    %204 = vector.shape_cast %203 : vector<1xf32> to vector<1x1x1xf32>
    %205 = vector.extract %204[0, 0, 0] : f32 from vector<1x1x1xf32>
    %206 = vector.broadcast %205 : f32 to vector<1x1xf32>
    %cst_32 = arith.constant 5.120000e+02 : f32
    %207 = vector.broadcast %cst_32 : f32 to vector<1x1xf32>
    %208 = arith.divf %206, %207 : vector<1x1xf32>
    %209 = arith.mulf %159, %159 : vector<2x256xf32>
    %210 = vector.shape_cast %209 : vector<2x256xf32> to vector<1x2x256xf32>
    %cst_33 = arith.constant dense<0.000000e+00> : vector<1xf32>
    %211 = vector.multi_reduction <add>, %210, %cst_33 [1, 2] : vector<1x2x256xf32> to vector<1xf32>
    %212 = vector.shape_cast %211 : vector<1xf32> to vector<1x1x1xf32>
    %213 = vector.extract %212[0, 0, 0] : f32 from vector<1x1x1xf32>
    %214 = vector.broadcast %213 : f32 to vector<1x1xf32>
    %cst_34 = arith.constant 5.120000e+02 : f32
    %215 = vector.broadcast %cst_34 : f32 to vector<1x1xf32>
    %216 = arith.divf %214, %215 : vector<1x1xf32>
    %217 = arith.mulf %208, %208 : vector<1x1xf32>
    %218 = arith.subf %216, %217 : vector<1x1xf32>
    %c25 = arith.constant 25 : index
    %219 = memref.load %arg0[%c25] : memref<36xf32, #tpu.memory_space<smem>>
    %cst_35 = arith.constant 9.99999974E-6 : f32
    %220 = vector.broadcast %cst_35 : f32 to vector<1x1xf32>
    %221 = arith.addf %218, %220 : vector<1x1xf32>
    %222 = math.rsqrt %221 : vector<1x1xf32>
    %223 = vector.broadcast %219 : f32 to vector<1x1xf32>
    %224 = arith.mulf %223, %222 : vector<1x1xf32>
    %c28 = arith.constant 28 : index
    %225 = memref.load %arg0[%c28] : memref<36xf32, #tpu.memory_space<smem>>
    %226 = arith.mulf %208, %224 : vector<1x1xf32>
    %227 = vector.broadcast %225 : f32 to vector<1x1xf32>
    %228 = arith.subf %227, %226 : vector<1x1xf32>
    %229 = vector.broadcast %224 : vector<1x1xf32> to vector<2x256xf32>
    %230 = arith.mulf %159, %229 : vector<2x256xf32>
    %231 = vector.broadcast %228 : vector<1x1xf32> to vector<2x256xf32>
    %232 = arith.addf %230, %231 : vector<2x256xf32>
    %233 = vector.shape_cast %170 : vector<2x256xf32> to vector<1x2x256xf32>
    %cst_36 = arith.constant dense<0.000000e+00> : vector<1xf32>
    %234 = vector.multi_reduction <add>, %233, %cst_36 [1, 2] : vector<1x2x256xf32> to vector<1xf32>
    %235 = vector.shape_cast %234 : vector<1xf32> to vector<1x1x1xf32>
    %236 = vector.extract %235[0, 0, 0] : f32 from vector<1x1x1xf32>
    %237 = vector.broadcast %236 : f32 to vector<1x1xf32>
    %cst_37 = arith.constant 5.120000e+02 : f32
    %238 = vector.broadcast %cst_37 : f32 to vector<1x1xf32>
    %239 = arith.divf %237, %238 : vector<1x1xf32>
    %240 = arith.mulf %170, %170 : vector<2x256xf32>
    %241 = vector.shape_cast %240 : vector<2x256xf32> to vector<1x2x256xf32>
    %cst_38 = arith.constant dense<0.000000e+00> : vector<1xf32>
    %242 = vector.multi_reduction <add>, %241, %cst_38 [1, 2] : vector<1x2x256xf32> to vector<1xf32>
    %243 = vector.shape_cast %242 : vector<1xf32> to vector<1x1x1xf32>
    %244 = vector.extract %243[0, 0, 0] : f32 from vector<1x1x1xf32>
    %245 = vector.broadcast %244 : f32 to vector<1x1xf32>
    %cst_39 = arith.constant 5.120000e+02 : f32
    %246 = vector.broadcast %cst_39 : f32 to vector<1x1xf32>
    %247 = arith.divf %245, %246 : vector<1x1xf32>
    %248 = arith.mulf %239, %239 : vector<1x1xf32>
    %249 = arith.subf %247, %248 : vector<1x1xf32>
    %c26 = arith.constant 26 : index
    %250 = memref.load %arg0[%c26] : memref<36xf32, #tpu.memory_space<smem>>
    %cst_40 = arith.constant 9.99999974E-6 : f32
    %251 = vector.broadcast %cst_40 : f32 to vector<1x1xf32>
    %252 = arith.addf %249, %251 : vector<1x1xf32>
    %253 = math.rsqrt %252 : vector<1x1xf32>
    %254 = vector.broadcast %250 : f32 to vector<1x1xf32>
    %255 = arith.mulf %254, %253 : vector<1x1xf32>
    %c29 = arith.constant 29 : index
    %256 = memref.load %arg0[%c29] : memref<36xf32, #tpu.memory_space<smem>>
    %257 = arith.mulf %239, %255 : vector<1x1xf32>
    %258 = vector.broadcast %256 : f32 to vector<1x1xf32>
    %259 = arith.subf %258, %257 : vector<1x1xf32>
    %260 = vector.broadcast %255 : vector<1x1xf32> to vector<2x256xf32>
    %261 = arith.mulf %170, %260 : vector<2x256xf32>
    %262 = vector.broadcast %259 : vector<1x1xf32> to vector<2x256xf32>
    %263 = arith.addf %261, %262 : vector<2x256xf32>
    %cst_41 = arith.constant 0.000000e+00 : f32
    %264 = vector.broadcast %cst_41 : f32 to vector<2x256xf32>
    %265 = arith.maximumf %201, %264 : vector<2x256xf32>
    %cst_42 = arith.constant 0.000000e+00 : f32
    %266 = vector.broadcast %cst_42 : f32 to vector<2x256xf32>
    %267 = arith.maximumf %232, %266 : vector<2x256xf32>
    %cst_43 = arith.constant 0.000000e+00 : f32
    %268 = vector.broadcast %cst_43 : f32 to vector<2x256xf32>
    %269 = arith.maximumf %263, %268 : vector<2x256xf32>
    %270 = vector.shape_cast %265 : vector<2x256xf32> to vector<1x2x256xf32>
    %cst_44 = arith.constant dense<0.000000e+00> : vector<1xf32>
    %271 = vector.multi_reduction <add>, %270, %cst_44 [1, 2] : vector<1x2x256xf32> to vector<1xf32>
    %272 = vector.shape_cast %271 : vector<1xf32> to vector<1x1x1xf32>
    %273 = vector.extract %272[0, 0, 0] : f32 from vector<1x1x1xf32>
    %274 = vector.broadcast %273 : f32 to vector<1x1xf32>
    %cst_45 = arith.constant 5.120000e+02 : f32
    %275 = vector.broadcast %cst_45 : f32 to vector<1x1xf32>
    %276 = arith.divf %274, %275 : vector<1x1xf32>
    %277 = arith.mulf %265, %265 : vector<2x256xf32>
    %278 = vector.shape_cast %277 : vector<2x256xf32> to vector<1x2x256xf32>
    %cst_46 = arith.constant dense<0.000000e+00> : vector<1xf32>
    %279 = vector.multi_reduction <add>, %278, %cst_46 [1, 2] : vector<1x2x256xf32> to vector<1xf32>
    %280 = vector.shape_cast %279 : vector<1xf32> to vector<1x1x1xf32>
    %281 = vector.extract %280[0, 0, 0] : f32 from vector<1x1x1xf32>
    %282 = vector.broadcast %281 : f32 to vector<1x1xf32>
    %cst_47 = arith.constant 5.120000e+02 : f32
    %283 = vector.broadcast %cst_47 : f32 to vector<1x1xf32>
    %284 = arith.divf %282, %283 : vector<1x1xf32>
    %285 = arith.mulf %276, %276 : vector<1x1xf32>
    %286 = arith.subf %284, %285 : vector<1x1xf32>
    %c30 = arith.constant 30 : index
    %287 = memref.load %arg0[%c30] : memref<36xf32, #tpu.memory_space<smem>>
    %cst_48 = arith.constant 9.99999974E-6 : f32
    %288 = vector.broadcast %cst_48 : f32 to vector<1x1xf32>
    %289 = arith.addf %286, %288 : vector<1x1xf32>
    %290 = math.rsqrt %289 : vector<1x1xf32>
    %291 = vector.broadcast %287 : f32 to vector<1x1xf32>
    %292 = arith.mulf %291, %290 : vector<1x1xf32>
    %c33 = arith.constant 33 : index
    %293 = memref.load %arg0[%c33] : memref<36xf32, #tpu.memory_space<smem>>
    %294 = arith.mulf %276, %292 : vector<1x1xf32>
    %295 = vector.broadcast %293 : f32 to vector<1x1xf32>
    %296 = arith.subf %295, %294 : vector<1x1xf32>
    %297 = vector.broadcast %292 : vector<1x1xf32> to vector<2x256xf32>
    %298 = arith.mulf %265, %297 : vector<2x256xf32>
    %299 = vector.broadcast %296 : vector<1x1xf32> to vector<2x256xf32>
    %300 = arith.addf %298, %299 : vector<2x256xf32>
    %301 = vector.shape_cast %267 : vector<2x256xf32> to vector<1x2x256xf32>
    %cst_49 = arith.constant dense<0.000000e+00> : vector<1xf32>
    %302 = vector.multi_reduction <add>, %301, %cst_49 [1, 2] : vector<1x2x256xf32> to vector<1xf32>
    %303 = vector.shape_cast %302 : vector<1xf32> to vector<1x1x1xf32>
    %304 = vector.extract %303[0, 0, 0] : f32 from vector<1x1x1xf32>
    %305 = vector.broadcast %304 : f32 to vector<1x1xf32>
    %cst_50 = arith.constant 5.120000e+02 : f32
    %306 = vector.broadcast %cst_50 : f32 to vector<1x1xf32>
    %307 = arith.divf %305, %306 : vector<1x1xf32>
    %308 = arith.mulf %267, %267 : vector<2x256xf32>
    %309 = vector.shape_cast %308 : vector<2x256xf32> to vector<1x2x256xf32>
    %cst_51 = arith.constant dense<0.000000e+00> : vector<1xf32>
    %310 = vector.multi_reduction <add>, %309, %cst_51 [1, 2] : vector<1x2x256xf32> to vector<1xf32>
    %311 = vector.shape_cast %310 : vector<1xf32> to vector<1x1x1xf32>
    %312 = vector.extract %311[0, 0, 0] : f32 from vector<1x1x1xf32>
    %313 = vector.broadcast %312 : f32 to vector<1x1xf32>
    %cst_52 = arith.constant 5.120000e+02 : f32
    %314 = vector.broadcast %cst_52 : f32 to vector<1x1xf32>
    %315 = arith.divf %313, %314 : vector<1x1xf32>
    %316 = arith.mulf %307, %307 : vector<1x1xf32>
    %317 = arith.subf %315, %316 : vector<1x1xf32>
    %c31 = arith.constant 31 : index
    %318 = memref.load %arg0[%c31] : memref<36xf32, #tpu.memory_space<smem>>
    %cst_53 = arith.constant 9.99999974E-6 : f32
    %319 = vector.broadcast %cst_53 : f32 to vector<1x1xf32>
    %320 = arith.addf %317, %319 : vector<1x1xf32>
    %321 = math.rsqrt %320 : vector<1x1xf32>
    %322 = vector.broadcast %318 : f32 to vector<1x1xf32>
    %323 = arith.mulf %322, %321 : vector<1x1xf32>
    %c34 = arith.constant 34 : index
    %324 = memref.load %arg0[%c34] : memref<36xf32, #tpu.memory_space<smem>>
    %325 = arith.mulf %307, %323 : vector<1x1xf32>
    %326 = vector.broadcast %324 : f32 to vector<1x1xf32>
    %327 = arith.subf %326, %325 : vector<1x1xf32>
    %328 = vector.broadcast %323 : vector<1x1xf32> to vector<2x256xf32>
    %329 = arith.mulf %267, %328 : vector<2x256xf32>
    %330 = vector.broadcast %327 : vector<1x1xf32> to vector<2x256xf32>
    %331 = arith.addf %329, %330 : vector<2x256xf32>
    %332 = vector.shape_cast %269 : vector<2x256xf32> to vector<1x2x256xf32>
    %cst_54 = arith.constant dense<0.000000e+00> : vector<1xf32>
    %333 = vector.multi_reduction <add>, %332, %cst_54 [1, 2] : vector<1x2x256xf32> to vector<1xf32>
    %334 = vector.shape_cast %333 : vector<1xf32> to vector<1x1x1xf32>
    %335 = vector.extract %334[0, 0, 0] : f32 from vector<1x1x1xf32>
    %336 = vector.broadcast %335 : f32 to vector<1x1xf32>
    %cst_55 = arith.constant 5.120000e+02 : f32
    %337 = vector.broadcast %cst_55 : f32 to vector<1x1xf32>
    %338 = arith.divf %336, %337 : vector<1x1xf32>
    %339 = arith.mulf %269, %269 : vector<2x256xf32>
    %340 = vector.shape_cast %339 : vector<2x256xf32> to vector<1x2x256xf32>
    %cst_56 = arith.constant dense<0.000000e+00> : vector<1xf32>
    %341 = vector.multi_reduction <add>, %340, %cst_56 [1, 2] : vector<1x2x256xf32> to vector<1xf32>
    %342 = vector.shape_cast %341 : vector<1xf32> to vector<1x1x1xf32>
    %343 = vector.extract %342[0, 0, 0] : f32 from vector<1x1x1xf32>
    %344 = vector.broadcast %343 : f32 to vector<1x1xf32>
    %cst_57 = arith.constant 5.120000e+02 : f32
    %345 = vector.broadcast %cst_57 : f32 to vector<1x1xf32>
    %346 = arith.divf %344, %345 : vector<1x1xf32>
    %347 = arith.mulf %338, %338 : vector<1x1xf32>
    %348 = arith.subf %346, %347 : vector<1x1xf32>
    %c32 = arith.constant 32 : index
    %349 = memref.load %arg0[%c32] : memref<36xf32, #tpu.memory_space<smem>>
    %cst_58 = arith.constant 9.99999974E-6 : f32
    %350 = vector.broadcast %cst_58 : f32 to vector<1x1xf32>
    %351 = arith.addf %348, %350 : vector<1x1xf32>
    %352 = math.rsqrt %351 : vector<1x1xf32>
    %353 = vector.broadcast %349 : f32 to vector<1x1xf32>
    %354 = arith.mulf %353, %352 : vector<1x1xf32>
    %c35 = arith.constant 35 : index
    %355 = memref.load %arg0[%c35] : memref<36xf32, #tpu.memory_space<smem>>
    %356 = arith.mulf %338, %354 : vector<1x1xf32>
    %357 = vector.broadcast %355 : f32 to vector<1x1xf32>
    %358 = arith.subf %357, %356 : vector<1x1xf32>
    %359 = vector.broadcast %354 : vector<1x1xf32> to vector<2x256xf32>
    %360 = arith.mulf %269, %359 : vector<2x256xf32>
    %361 = vector.broadcast %358 : vector<1x1xf32> to vector<2x256xf32>
    %362 = arith.addf %360, %361 : vector<2x256xf32>
    %c0_59 = arith.constant 0 : index
    %c0_60 = arith.constant 0 : index
    %c0_61 = arith.constant 0 : index
    %363 = vector.load %arg2[%c0_59, %c0_60, %c0_61] : memref<2x3x256xf32, #tpu.memory_space<vmem>>, vector<2x1x256xf32>
    %364 = vector.shape_cast %363 : vector<2x1x256xf32> to vector<2x256xf32>
    %365 = vector.shape_cast %300 : vector<2x256xf32> to vector<2x1x256xf32>
    tpu.vector_store %arg2[%c0_59, %c0_60, %c0_61], %365 {strides = array<i32>} : memref<2x3x256xf32, #tpu.memory_space<vmem>>, vector<2x1x256xf32>,
    %c0_62 = arith.constant 0 : index
    %c1_63 = arith.constant 1 : index
    %c0_64 = arith.constant 0 : index
    %366 = vector.load %arg2[%c0_62, %c1_63, %c0_64] : memref<2x3x256xf32, #tpu.memory_space<vmem>>, vector<2x1x256xf32>
    %367 = vector.shape_cast %366 : vector<2x1x256xf32> to vector<2x256xf32>
    %368 = vector.shape_cast %331 : vector<2x256xf32> to vector<2x1x256xf32>
    tpu.vector_store %arg2[%c0_62, %c1_63, %c0_64], %368 {strides = array<i32>} : memref<2x3x256xf32, #tpu.memory_space<vmem>>, vector<2x1x256xf32>,
    %c0_65 = arith.constant 0 : index
    %c2_66 = arith.constant 2 : index
    %c0_67 = arith.constant 0 : index
    %369 = vector.load %arg2[%c0_65, %c2_66, %c0_67] : memref<2x3x256xf32, #tpu.memory_space<vmem>>, vector<2x1x256xf32>
    %370 = vector.shape_cast %369 : vector<2x1x256xf32> to vector<2x256xf32>
    %371 = vector.shape_cast %362 : vector<2x256xf32> to vector<2x1x256xf32>
    tpu.vector_store %arg2[%c0_65, %c2_66, %c0_67], %371 {strides = array<i32>} : memref<2x3x256xf32, #tpu.memory_space<vmem>>, vector<2x1x256xf32>,
    return
  }
}

</mosaic_0001>

<llo_original>
// kernel: advanced_model_forward.1
$region0: #{advanced_model_forward.1}
  #allocation0 [shape = 'u32[]', space=smem, size = 0x4, offset = 0x4, fixed_abs, tag = 'smem constant byte address 0x4 - core index']
  #allocation1 [shape = 'u32[72,128]{1,0:T(1,128)}', space=vmem, size = 0x9000, scoped, tag = 'internal scratch']
  %s0 = inlined_call_operand.vmem [shape: f32[36], index: 0, kind: input, shape index: {}]
  %s1 = inlined_call_operand.vmem [shape: f32[2,3,256], index: 1, kind: input, shape index: {}]
  %s2 = inlined_call_operand.vmem [shape: f32[2,3,256], index: 2, kind: output, shape index: {}]
  %s3 = sld [smem:[#allocation0]]
  $region22: #{advanced_model_forward.1} parent=0
    _
  %s5 = ssub.s32 1, %s3
  %s6 = scalar_select 0, %s5, %s3
  $region1: #{advanced_model_forward.1} parent=0
    #allocation2 [shape = 'u8[512]{0}', space=smem, size = 0x200, scoped, tag = 'input window, operand 0, single buffered']
    #allocation3 [shape = 's32[1]{0}', space=sflag, size = 0x4, scoped, tag = 'scoped memory for advanced_model_forward.1']
    %7 = vsyncpa [#allocation3], 0
    // Predicated region
    $region2: #{advanced_model_forward.1} parent=1 // pred_check
      _
    $region3: #{advanced_model_forward.1} parent=1 // pred_check_branch
      %9 = sbr.rel (0) target = $region5
    $region4: #{advanced_model_forward.1} parent=1 // pred_region
      %11 = vsyncadd [#allocation3], 0
      %s13 = sshll.u32 %s0, 4
      %s14 = int_to_ptr.vmem [resolvable:$true] %s13
      %16 = dma.vmem_to_smem %s14, 16, [#allocation2], [#allocation3]
    $region5: #{advanced_model_forward.1} parent=1 // pred_fallthru
      _
    // Predicated region
    $region6: #{advanced_model_forward.1} parent=1 // pred_check
      _
    $region7: #{advanced_model_forward.1} parent=1 // pred_check_branch
      %18 = sbr.rel (0) target = $region9
    $region8: #{advanced_model_forward.1} parent=1 // pred_region
      _
    $region9: #{advanced_model_forward.1} parent=1 // pred_fallthru
      _
    // Predicated region
    $region10: #{advanced_model_forward.1} parent=1 // pred_check
      _
    $region11: #{advanced_model_forward.1} parent=1 // pred_check_branch
      %20 = sbr.rel (0) target = $region13
    $region12: #{advanced_model_forward.1} parent=1 // pred_region
      %22 = dma.done [#allocation3], 16
    $region13: #{advanced_model_forward.1} parent=1 // pred_fallthru
      _
    %23 = sfence
    %v24 = vld [vmem:[%s1] ss:$4 sm:$0x3]
    %s25 = scalar_lea.vmem %s1, 8
    %v26 = vld [vmem:[%s25] ss:$4 sm:$0x3]
    %s27 = scalar_lea.vmem %s1, 1
    %v28 = vld [vmem:[%s27] ss:$4 sm:$0x3]
    %s29 = scalar_lea.vmem %s1, 9
    %v30 = vld [vmem:[%s29] ss:$4 sm:$0x3]
    %s31 = scalar_lea.vmem %s1, 2
    %v32 = vld [vmem:[%s31] ss:$4 sm:$0x3]
    %s33 = scalar_lea.vmem %s1, 10
    %v34 = vld [vmem:[%s33] ss:$4 sm:$0x3]
    %s35 = sld [smem:[#allocation2]]
    %v36 = vstv %s35
    %v37 = vmul.f32 %v36, %v24
    %v38 = vmul.f32 %v36, %v26
    %s39 = sld [smem:[#allocation2 + $0x1]]
    %v40 = vstv %s39
    %v41 = vmul.f32 %v40, %v28
    %v42 = vmul.f32 %v40, %v30
    %v43 = vadd.f32 %v37, %v41
    %v44 = vadd.f32 %v38, %v42
    %s45 = sld [smem:[#allocation2 + $0x2]]
    %v46 = vstv %s45
    %v47 = vmul.f32 %v46, %v32
    %v48 = vmul.f32 %v46, %v34
    %v49 = vadd.f32 %v43, %v47
    %v50 = vadd.f32 %v44, %v48
    %s51 = sld [smem:[#allocation2 + $0x3]]
    %v52 = vstv %s51
    %v53 = vmul.f32 %v52, %v24
    %v54 = vmul.f32 %v52, %v26
    %s55 = sld [smem:[#allocation2 + $0x4]]
    %v56 = vstv %s55
    %v57 = vmul.f32 %v56, %v28
    %v58 = vmul.f32 %v56, %v30
    %v59 = vadd.f32 %v53, %v57
    %v60 = vadd.f32 %v54, %v58
    %s61 = sld [smem:[#allocation2 + $0x5]]
    %v62 = vstv %s61
    %v63 = vmul.f32 %v62, %v32
    %v64 = vmul.f32 %v62, %v34
    %v65 = vadd.f32 %v59, %v63
    %v66 = vadd.f32 %v60, %v64
    %s67 = sld [smem:[#allocation2 + $0x6]]
    %v68 = vstv %s67
    %v69 = vmul.f32 %v68, %v24
    %v70 = vmul.f32 %v68, %v26
    %s71 = sld [smem:[#allocation2 + $0x7]]
    %v72 = vstv %s71
    %v73 = vmul.f32 %v72, %v28
    %v74 = vmul.f32 %v72, %v30
    %v75 = vadd.f32 %v69, %v73
    %v76 = vadd.f32 %v70, %v74
    %s77 = sld [smem:[#allocation2 + $0x8]]
    %v78 = vstv %s77
    %v79 = vmul.f32 %v78, %v32
    %v80 = vmul.f32 %v78, %v34
    %v81 = vadd.f32 %v75, %v79
    %v82 = vadd.f32 %v76, %v80
    %85 = vst [vmem:[#allocation1] ss:$9 sm:$0xff] %v49
    %s86 = scalar_lea.vmem [#allocation1], 1
    %87 = vst [vmem:[%s86] ss:$9 sm:$0xff] %v50
    %v88 = vld [vmem:[#allocation1] sm:$0xff]
    %v89 = vld [vmem:[#allocation1 + $0x9] sm:$0xff]
    %vm92 = vcmask 1041408
    %v93 = vsel %vm92, %v88, 0.0
    %v94 = vsel %vm92, %v89, 0.0
    %v95 = vadd.f32 %v93, %v94
    %96 = vadd.xlane.f32.xlu0 %v95
    %v97 = vpop.xlane.xlu0 %96
    %v98 = vrot.slane %v97, 4
    %v99 = vadd.f32 %v97, %v98
    %v100 = vrot.slane %v99, 2
    %v101 = vadd.f32 %v99, %v100
    %v102 = vrot.slane %v101, 1
    %v103 = vadd.f32 %v101, %v102
    %s104 = vtos %v103
    %v105 = vstv %s104
    %v106 = vrcp.pop 512.0
    %v107 = vmul.f32 512.0, %v106
    %v108 = vsub.f32 1.0, %v107
    %v109 = vmul.f32 %v106, %v108
    %v110 = vadd.f32 %v106, %v109
    %vm111 = vweird.f32 %v106
    %v112 = vsel %vm111, %v106, %v110
    %v113 = vmul.f32 %v105, %v112
    %v114 = vmul.f32 %v49, %v49
    %v115 = vmul.f32 %v50, %v50
    %118 = vst [vmem:[#allocation1] ss:$9 sm:$0xff] %v114
    %s119 = scalar_lea.vmem [#allocation1], 1
    %120 = vst [vmem:[%s119] ss:$9 sm:$0xff] %v115
    %v121 = vld [vmem:[#allocation1] sm:$0xff]
    %v122 = vld [vmem:[#allocation1 + $0x9] sm:$0xff]
    %v125 = vsel %vm92, %v121, 0.0
    %v126 = vsel %vm92, %v122, 0.0
    %v127 = vadd.f32 %v125, %v126
    %128 = vadd.xlane.f32.xlu0 %v127
    %v129 = vpop.xlane.xlu0 %128
    %v130 = vrot.slane %v129, 4
    %v131 = vadd.f32 %v129, %v130
    %v132 = vrot.slane %v131, 2
    %v133 = vadd.f32 %v131, %v132
    %v134 = vrot.slane %v133, 1
    %v135 = vadd.f32 %v133, %v134
    %s136 = vtos %v135
    %v137 = vstv %s136
    %v138 = vmul.f32 %v137, %v112
    %v139 = vmul.f32 %v113, %v113
    %v140 = vsub.f32 %v138, %v139
    %s141 = sld [smem:[#allocation2 + $0x12]]
    %v142 = vadd.f32 %v140, 1e-05
    %v143 = vrsqrt.pop %v142
    %v144 = vmul.f32 %v143, %v142
    %v145 = vmul.f32 %v144, %v143
    %v146 = vmul.f32 0.5, %v145
    %v147 = vsub.f32 1.5, %v146
    %v148 = vmul.f32 %v143, %v147
    %vm149 = vweird.f32 %v142
    %vm150 = vweird.f32 %v143
    %vm151 = vmor %vm149, %vm150
    %v152 = vsel %vm151, %v143, %v148
    %v153 = vstv %s141
    %v154 = vmul.f32 %v153, %v152
    %s155 = sld [smem:[#allocation2 + $0x15]]
    %v156 = vmul.f32 %v113, %v154
    %v157 = vstv %s155
    %v158 = vsub.f32 %v157, %v156
    %v159 = vmul.f32 %v49, %v154
    %v160 = vmul.f32 %v50, %v154
    %v161 = vadd.f32 %v159, %v158
    %v162 = vadd.f32 %v160, %v158
    %165 = vst [vmem:[#allocation1] ss:$9 sm:$0xff] %v65
    %s166 = scalar_lea.vmem [#allocation1], 1
    %167 = vst [vmem:[%s166] ss:$9 sm:$0xff] %v66
    %v168 = vld [vmem:[#allocation1] sm:$0xff]
    %v169 = vld [vmem:[#allocation1 + $0x9] sm:$0xff]
    %v172 = vsel %vm92, %v168, 0.0
    %v173 = vsel %vm92, %v169, 0.0
    %v174 = vadd.f32 %v172, %v173
    %175 = vadd.xlane.f32.xlu0 %v174
    %v176 = vpop.xlane.xlu0 %175
    %v177 = vrot.slane %v176, 4
    %v178 = vadd.f32 %v176, %v177
    %v179 = vrot.slane %v178, 2
    %v180 = vadd.f32 %v178, %v179
    %v181 = vrot.slane %v180, 1
    %v182 = vadd.f32 %v180, %v181
    %s183 = vtos %v182
    %v184 = vstv %s183
    %v185 = vmul.f32 %v184, %v112
    %v186 = vmul.f32 %v65, %v65
    %v187 = vmul.f32 %v66, %v66
    %190 = vst [vmem:[#allocation1] ss:$9 sm:$0xff] %v186
    %s191 = scalar_lea.vmem [#allocation1], 1
    %192 = vst [vmem:[%s191] ss:$9 sm:$0xff] %v187
    %v193 = vld [vmem:[#allocation1] sm:$0xff]
    %v194 = vld [vmem:[#allocation1 + $0x9] sm:$0xff]
    %v197 = vsel %vm92, %v193, 0.0
    %v198 = vsel %vm92, %v194, 0.0
    %v199 = vadd.f32 %v197, %v198
    %200 = vadd.xlane.f32.xlu0 %v199
    %v201 = vpop.xlane.xlu0 %200
    %v202 = vrot.slane %v201, 4
    %v203 = vadd.f32 %v201, %v202
    %v204 = vrot.slane %v203, 2
    %v205 = vadd.f32 %v203, %v204
    %v206 = vrot.slane %v205, 1
    %v207 = vadd.f32 %v205, %v206
    %s208 = vtos %v207
    %v209 = vstv %s208
    %v210 = vmul.f32 %v209, %v112
    %v211 = vmul.f32 %v185, %v185
    %v212 = vsub.f32 %v210, %v211
    %s213 = sld [smem:[#allocation2 + $0x13]]
    %v214 = vadd.f32 %v212, 1e-05
    %v215 = vrsqrt.pop %v214
    %v216 = vmul.f32 %v215, %v214
    %v217 = vmul.f32 %v216, %v215
    %v218 = vmul.f32 0.5, %v217
    %v219 = vsub.f32 1.5, %v218
    %v220 = vmul.f32 %v215, %v219
    %vm221 = vweird.f32 %v214
    %vm222 = vweird.f32 %v215
    %vm223 = vmor %vm221, %vm222
    %v224 = vsel %vm223, %v215, %v220
    %v225 = vstv %s213
    %v226 = vmul.f32 %v225, %v224
    %s227 = sld [smem:[#allocation2 + $0x16]]
    %v228 = vmul.f32 %v185, %v226
    %v229 = vstv %s227
    %v230 = vsub.f32 %v229, %v228
    %v231 = vmul.f32 %v65, %v226
    %v232 = vmul.f32 %v66, %v226
    %v233 = vadd.f32 %v231, %v230
    %v234 = vadd.f32 %v232, %v230
    %237 = vst [vmem:[#allocation1] ss:$9 sm:$0xff] %v81
    %s238 = scalar_lea.vmem [#allocation1], 1
    %239 = vst [vmem:[%s238] ss:$9 sm:$0xff] %v82
    %v240 = vld [vmem:[#allocation1] sm:$0xff]
    %v241 = vld [vmem:[#allocation1 + $0x9] sm:$0xff]
    %v244 = vsel %vm92, %v240, 0.0
    %v245 = vsel %vm92, %v241, 0.0
    %v246 = vadd.f32 %v244, %v245
    %247 = vadd.xlane.f32.xlu0 %v246
    %v248 = vpop.xlane.xlu0 %247
    %v249 = vrot.slane %v248, 4
    %v250 = vadd.f32 %v248, %v249
    %v251 = vrot.slane %v250, 2
    %v252 = vadd.f32 %v250, %v251
    %v253 = vrot.slane %v252, 1
    %v254 = vadd.f32 %v252, %v253
    %s255 = vtos %v254
    %v256 = vstv %s255
    %v257 = vmul.f32 %v256, %v112
    %v258 = vmul.f32 %v81, %v81
    %v259 = vmul.f32 %v82, %v82
    %262 = vst [vmem:[#allocation1] ss:$9 sm:$0xff] %v258
    %s263 = scalar_lea.vmem [#allocation1], 1
    %264 = vst [vmem:[%s263] ss:$9 sm:$0xff] %v259
    %v265 = vld [vmem:[#allocation1] sm:$0xff]
    %v266 = vld [vmem:[#allocation1 + $0x9] sm:$0xff]
    %v269 = vsel %vm92, %v265, 0.0
    %v270 = vsel %vm92, %v266, 0.0
    %v271 = vadd.f32 %v269, %v270
    %272 = vadd.xlane.f32.xlu0 %v271
    %v273 = vpop.xlane.xlu0 %272
    %v274 = vrot.slane %v273, 4
    %v275 = vadd.f32 %v273, %v274
    %v276 = vrot.slane %v275, 2
    %v277 = vadd.f32 %v275, %v276
    %v278 = vrot.slane %v277, 1
    %v279 = vadd.f32 %v277, %v278
    %s280 = vtos %v279
    %v281 = vstv %s280
    %v282 = vmul.f32 %v281, %v112
    %v283 = vmul.f32 %v257, %v257
    %v284 = vsub.f32 %v282, %v283
    %s285 = sld [smem:[#allocation2 + $0x14]]
    %v286 = vadd.f32 %v284, 1e-05
    %v287 = vrsqrt.pop %v286
    %v288 = vmul.f32 %v287, %v286
    %v289 = vmul.f32 %v288, %v287
    %v290 = vmul.f32 0.5, %v289
    %v291 = vsub.f32 1.5, %v290
    %v292 = vmul.f32 %v287, %v291
    %vm293 = vweird.f32 %v286
    %vm294 = vweird.f32 %v287
    %vm295 = vmor %vm293, %vm294
    %v296 = vsel %vm295, %v287, %v292
    %v297 = vstv %s285
    %v298 = vmul.f32 %v297, %v296
    %s299 = sld [smem:[#allocation2 + $0x17]]
    %v300 = vmul.f32 %v257, %v298
    %v301 = vstv %s299
    %v302 = vsub.f32 %v301, %v300
    %v303 = vmul.f32 %v81, %v298
    %v304 = vmul.f32 %v82, %v298
    %v305 = vadd.f32 %v303, %v302
    %v306 = vadd.f32 %v304, %v302
    %v307 = vmax.f32 %v161, 0.0
    %v308 = vmax.f32 %v162, 0.0
    %v309 = vmax.f32 %v233, 0.0
    %v310 = vmax.f32 %v234, 0.0
    %v311 = vmax.f32 %v305, 0.0
    %v312 = vmax.f32 %v306, 0.0
    %s313 = sld [smem:[#allocation2 + $0x9]]
    %v314 = vstv %s313
    %v315 = vmul.f32 %v314, %v307
    %v316 = vmul.f32 %v314, %v308
    %s317 = sld [smem:[#allocation2 + $0xa]]
    %v318 = vstv %s317
    %v319 = vmul.f32 %v318, %v309
    %v320 = vmul.f32 %v318, %v310
    %v321 = vadd.f32 %v315, %v319
    %v322 = vadd.f32 %v316, %v320
    %s323 = sld [smem:[#allocation2 + $0xb]]
    %v324 = vstv %s323
    %v325 = vmul.f32 %v324, %v311
    %v326 = vmul.f32 %v324, %v312
    %v327 = vadd.f32 %v321, %v325
    %v328 = vadd.f32 %v322, %v326
    %s329 = sld [smem:[#allocation2 + $0xc]]
    %v330 = vstv %s329
    %v331 = vmul.f32 %v330, %v307
    %v332 = vmul.f32 %v330, %v308
    %s333 = sld [smem:[#allocation2 + $0xd]]
    %v334 = vstv %s333
    %v335 = vmul.f32 %v334, %v309
    %v336 = vmul.f32 %v334, %v310
    %v337 = vadd.f32 %v331, %v335
    %v338 = vadd.f32 %v332, %v336
    %s339 = sld [smem:[#allocation2 + $0xe]]
    %v340 = vstv %s339
    %v341 = vmul.f32 %v340, %v311
    %v342 = vmul.f32 %v340, %v312
    %v343 = vadd.f32 %v337, %v341
    %v344 = vadd.f32 %v338, %v342
    %s345 = sld [smem:[#allocation2 + $0xf]]
    %v346 = vstv %s345
    %v347 = vmul.f32 %v346, %v307
    %v348 = vmul.f32 %v346, %v308
    %s349 = sld [smem:[#allocation2 + $0x10]]
    %v350 = vstv %s349
    %v351 = vmul.f32 %v350, %v309
    %v352 = vmul.f32 %v350, %v310
    %v353 = vadd.f32 %v347, %v351
    %v354 = vadd.f32 %v348, %v352
    %s355 = sld [smem:[#allocation2 + $0x11]]
    %v356 = vstv %s355
    %v357 = vmul.f32 %v356, %v311
    %v358 = vmul.f32 %v356, %v312
    %v359 = vadd.f32 %v353, %v357
    %v360 = vadd.f32 %v354, %v358
    %363 = vst [vmem:[#allocation1] ss:$9 sm:$0xff] %v327
    %s364 = scalar_lea.vmem [#allocation1], 1
    %365 = vst [vmem:[%s364] ss:$9 sm:$0xff] %v328
    %v366 = vld [vmem:[#allocation1] sm:$0xff]
    %v367 = vld [vmem:[#allocation1 + $0x9] sm:$0xff]
    %v370 = vsel %vm92, %v366, 0.0
    %v371 = vsel %vm92, %v367, 0.0
    %v372 = vadd.f32 %v370, %v371
    %373 = vadd.xlane.f32.xlu0 %v372
    %v374 = vpop.xlane.xlu0 %373
    %v375 = vrot.slane %v374, 4
    %v376 = vadd.f32 %v374, %v375
    %v377 = vrot.slane %v376, 2
    %v378 = vadd.f32 %v376, %v377
    %v379 = vrot.slane %v378, 1
    %v380 = vadd.f32 %v378, %v379
    %s381 = vtos %v380
    %v382 = vstv %s381
    %v383 = vmul.f32 %v382, %v112
    %v384 = vmul.f32 %v327, %v327
    %v385 = vmul.f32 %v328, %v328
    %388 = vst [vmem:[#allocation1] ss:$9 sm:$0xff] %v384
    %s389 = scalar_lea.vmem [#allocation1], 1
    %390 = vst [vmem:[%s389] ss:$9 sm:$0xff] %v385
    %v391 = vld [vmem:[#allocation1] sm:$0xff]
    %v392 = vld [vmem:[#allocation1 + $0x9] sm:$0xff]
    %v395 = vsel %vm92, %v391, 0.0
    %v396 = vsel %vm92, %v392, 0.0
    %v397 = vadd.f32 %v395, %v396
    %398 = vadd.xlane.f32.xlu0 %v397
    %v399 = vpop.xlane.xlu0 %398
    %v400 = vrot.slane %v399, 4
    %v401 = vadd.f32 %v399, %v400
    %v402 = vrot.slane %v401, 2
    %v403 = vadd.f32 %v401, %v402
    %v404 = vrot.slane %v403, 1
    %v405 = vadd.f32 %v403, %v404
    %s406 = vtos %v405
    %v407 = vstv %s406
    %v408 = vmul.f32 %v407, %v112
    %v409 = vmul.f32 %v383, %v383
    %v410 = vsub.f32 %v408, %v409
    %s411 = sld [smem:[#allocation2 + $0x18]]
    %v412 = vadd.f32 %v410, 1e-05
    %v413 = vrsqrt.pop %v412
    %v414 = vmul.f32 %v413, %v412
    %v415 = vmul.f32 %v414, %v413
    %v416 = vmul.f32 0.5, %v415
    %v417 = vsub.f32 1.5, %v416
    %v418 = vmul.f32 %v413, %v417
    %vm419 = vweird.f32 %v412
    %vm420 = vweird.f32 %v413
    %vm421 = vmor %vm419, %vm420
    %v422 = vsel %vm421, %v413, %v418
    %v423 = vstv %s411
    %v424 = vmul.f32 %v423, %v422
    %s425 = sld [smem:[#allocation2 + $0x1b]]
    %v426 = vmul.f32 %v383, %v424
    %v427 = vstv %s425
    %v428 = vsub.f32 %v427, %v426
    %v429 = vmul.f32 %v327, %v424
    %v430 = vmul.f32 %v328, %v424
    %v431 = vadd.f32 %v429, %v428
    %v432 = vadd.f32 %v430, %v428
    %435 = vst [vmem:[#allocation1] ss:$9 sm:$0xff] %v343
    %s436 = scalar_lea.vmem [#allocation1], 1
    %437 = vst [vmem:[%s436] ss:$9 sm:$0xff] %v344
    %v438 = vld [vmem:[#allocation1] sm:$0xff]
    %v439 = vld [vmem:[#allocation1 + $0x9] sm:$0xff]
    %v442 = vsel %vm92, %v438, 0.0
    %v443 = vsel %vm92, %v439, 0.0
    %v444 = vadd.f32 %v442, %v443
    %445 = vadd.xlane.f32.xlu0 %v444
    %v446 = vpop.xlane.xlu0 %445
    %v447 = vrot.slane %v446, 4
    %v448 = vadd.f32 %v446, %v447
    %v449 = vrot.slane %v448, 2
    %v450 = vadd.f32 %v448, %v449
    %v451 = vrot.slane %v450, 1
    %v452 = vadd.f32 %v450, %v451
    %s453 = vtos %v452
    %v454 = vstv %s453
    %v455 = vmul.f32 %v454, %v112
    %v456 = vmul.f32 %v343, %v343
    %v457 = vmul.f32 %v344, %v344
    %460 = vst [vmem:[#allocation1] ss:$9 sm:$0xff] %v456
    %s461 = scalar_lea.vmem [#allocation1], 1
    %462 = vst [vmem:[%s461] ss:$9 sm:$0xff] %v457
    %v463 = vld [vmem:[#allocation1] sm:$0xff]
    %v464 = vld [vmem:[#allocation1 + $0x9] sm:$0xff]
    %v467 = vsel %vm92, %v463, 0.0
    %v468 = vsel %vm92, %v464, 0.0
    %v469 = vadd.f32 %v467, %v468
    %470 = vadd.xlane.f32.xlu0 %v469
    %v471 = vpop.xlane.xlu0 %470
    %v472 = vrot.slane %v471, 4
    %v473 = vadd.f32 %v471, %v472
    %v474 = vrot.slane %v473, 2
    %v475 = vadd.f32 %v473, %v474
    %v476 = vrot.slane %v475, 1
    %v477 = vadd.f32 %v475, %v476
    %s478 = vtos %v477
    %v479 = vstv %s478
    %v480 = vmul.f32 %v479, %v112
    %v481 = vmul.f32 %v455, %v455
    %v482 = vsub.f32 %v480, %v481
    %s483 = sld [smem:[#allocation2 + $0x19]]
    %v484 = vadd.f32 %v482, 1e-05
    %v485 = vrsqrt.pop %v484
    %v486 = vmul.f32 %v485, %v484
    %v487 = vmul.f32 %v486, %v485
    %v488 = vmul.f32 0.5, %v487
    %v489 = vsub.f32 1.5, %v488
    %v490 = vmul.f32 %v485, %v489
    %vm491 = vweird.f32 %v484
    %vm492 = vweird.f32 %v485
    %vm493 = vmor %vm491, %vm492
    %v494 = vsel %vm493, %v485, %v490
    %v495 = vstv %s483
    %v496 = vmul.f32 %v495, %v494
    %s497 = sld [smem:[#allocation2 + $0x1c]]
    %v498 = vmul.f32 %v455, %v496
    %v499 = vstv %s497
    %v500 = vsub.f32 %v499, %v498
    %v501 = vmul.f32 %v343, %v496
    %v502 = vmul.f32 %v344, %v496
    %v503 = vadd.f32 %v501, %v500
    %v504 = vadd.f32 %v502, %v500
    %507 = vst [vmem:[#allocation1] ss:$9 sm:$0xff] %v359
    %s508 = scalar_lea.vmem [#allocation1], 1
    %509 = vst [vmem:[%s508] ss:$9 sm:$0xff] %v360
    %v510 = vld [vmem:[#allocation1] sm:$0xff]
    %v511 = vld [vmem:[#allocation1 + $0x9] sm:$0xff]
    %v514 = vsel %vm92, %v510, 0.0
    %v515 = vsel %vm92, %v511, 0.0
    %v516 = vadd.f32 %v514, %v515
    %517 = vadd.xlane.f32.xlu0 %v516
    %v518 = vpop.xlane.xlu0 %517
    %v519 = vrot.slane %v518, 4
    %v520 = vadd.f32 %v518, %v519
    %v521 = vrot.slane %v520, 2
    %v522 = vadd.f32 %v520, %v521
    %v523 = vrot.slane %v522, 1
    %v524 = vadd.f32 %v522, %v523
    %s525 = vtos %v524
    %v526 = vstv %s525
    %v527 = vmul.f32 %v526, %v112
    %v528 = vmul.f32 %v359, %v359
    %v529 = vmul.f32 %v360, %v360
    %532 = vst [vmem:[#allocation1] ss:$9 sm:$0xff] %v528
    %s533 = scalar_lea.vmem [#allocation1], 1
    %534 = vst [vmem:[%s533] ss:$9 sm:$0xff] %v529
    %v535 = vld [vmem:[#allocation1] sm:$0xff]
    %v536 = vld [vmem:[#allocation1 + $0x9] sm:$0xff]
    %v539 = vsel %vm92, %v535, 0.0
    %v540 = vsel %vm92, %v536, 0.0
    %v541 = vadd.f32 %v539, %v540
    %542 = vadd.xlane.f32.xlu0 %v541
    %v543 = vpop.xlane.xlu0 %542
    %v544 = vrot.slane %v543, 4
    %v545 = vadd.f32 %v543, %v544
    %v546 = vrot.slane %v545, 2
    %v547 = vadd.f32 %v545, %v546
    %v548 = vrot.slane %v547, 1
    %v549 = vadd.f32 %v547, %v548
    %s550 = vtos %v549
    %v551 = vstv %s550
    %v552 = vmul.f32 %v551, %v112
    %v553 = vmul.f32 %v527, %v527
    %v554 = vsub.f32 %v552, %v553
    %s555 = sld [smem:[#allocation2 + $0x1a]]
    %v556 = vadd.f32 %v554, 1e-05
    %v557 = vrsqrt.pop %v556
    %v558 = vmul.f32 %v557, %v556
    %v559 = vmul.f32 %v558, %v557
    %v560 = vmul.f32 0.5, %v559
    %v561 = vsub.f32 1.5, %v560
    %v562 = vmul.f32 %v557, %v561
    %vm563 = vweird.f32 %v556
    %vm564 = vweird.f32 %v557
    %vm565 = vmor %vm563, %vm564
    %v566 = vsel %vm565, %v557, %v562
    %v567 = vstv %s555
    %v568 = vmul.f32 %v567, %v566
    %s569 = sld [smem:[#allocation2 + $0x1d]]
    %v570 = vmul.f32 %v527, %v568
    %v571 = vstv %s569
    %v572 = vsub.f32 %v571, %v570
    %v573 = vmul.f32 %v359, %v568
    %v574 = vmul.f32 %v360, %v568
    %v575 = vadd.f32 %v573, %v572
    %v576 = vadd.f32 %v574, %v572
    %v577 = vmax.f32 %v431, 0.0
    %v578 = vmax.f32 %v432, 0.0
    %v579 = vmax.f32 %v503, 0.0
    %v580 = vmax.f32 %v504, 0.0
    %v581 = vmax.f32 %v575, 0.0
    %v582 = vmax.f32 %v576, 0.0
    %585 = vst [vmem:[#allocation1] ss:$9 sm:$0xff] %v577
    %s586 = scalar_lea.vmem [#allocation1], 1
    %587 = vst [vmem:[%s586] ss:$9 sm:$0xff] %v578
    %v588 = vld [vmem:[#allocation1] sm:$0xff]
    %v589 = vld [vmem:[#allocation1 + $0x9] sm:$0xff]
    %v592 = vsel %vm92, %v588, 0.0
    %v593 = vsel %vm92, %v589, 0.0
    %v594 = vadd.f32 %v592, %v593
    %595 = vadd.xlane.f32.xlu0 %v594
    %v596 = vpop.xlane.xlu0 %595
    %v597 = vrot.slane %v596, 4
    %v598 = vadd.f32 %v596, %v597
    %v599 = vrot.slane %v598, 2
    %v600 = vadd.f32 %v598, %v599
    %v601 = vrot.slane %v600, 1
    %v602 = vadd.f32 %v600, %v601
    %s603 = vtos %v602
    %v604 = vstv %s603
    %v605 = vmul.f32 %v604, %v112
    %v606 = vmul.f32 %v577, %v577
    %v607 = vmul.f32 %v578, %v578
    %610 = vst [vmem:[#allocation1] ss:$9 sm:$0xff] %v606
    %s611 = scalar_lea.vmem [#allocation1], 1
    %612 = vst [vmem:[%s611] ss:$9 sm:$0xff] %v607
    %v613 = vld [vmem:[#allocation1] sm:$0xff]
    %v614 = vld [vmem:[#allocation1 + $0x9] sm:$0xff]
    %v617 = vsel %vm92, %v613, 0.0
    %v618 = vsel %vm92, %v614, 0.0
    %v619 = vadd.f32 %v617, %v618
    %620 = vadd.xlane.f32.xlu0 %v619
    %v621 = vpop.xlane.xlu0 %620
    %v622 = vrot.slane %v621, 4
    %v623 = vadd.f32 %v621, %v622
    %v624 = vrot.slane %v623, 2
    %v625 = vadd.f32 %v623, %v624
    %v626 = vrot.slane %v625, 1
    %v627 = vadd.f32 %v625, %v626
    %s628 = vtos %v627
    %v629 = vstv %s628
    %v630 = vmul.f32 %v629, %v112
    %v631 = vmul.f32 %v605, %v605
    %v632 = vsub.f32 %v630, %v631
    %s633 = sld [smem:[#allocation2 + $0x1e]]
    %v634 = vadd.f32 %v632, 1e-05
    %v635 = vrsqrt.pop %v634
    %v636 = vmul.f32 %v635, %v634
    %v637 = vmul.f32 %v636, %v635
    %v638 = vmul.f32 0.5, %v637
    %v639 = vsub.f32 1.5, %v638
    %v640 = vmul.f32 %v635, %v639
    %vm641 = vweird.f32 %v634
    %vm642 = vweird.f32 %v635
    %vm643 = vmor %vm641, %vm642
    %v644 = vsel %vm643, %v635, %v640
    %v645 = vstv %s633
    %v646 = vmul.f32 %v645, %v644
    %s647 = sld [smem:[#allocation2 + $0x21]]
    %v648 = vmul.f32 %v605, %v646
    %v649 = vstv %s647
    %v650 = vsub.f32 %v649, %v648
    %v651 = vmul.f32 %v577, %v646
    %v652 = vmul.f32 %v578, %v646
    %v653 = vadd.f32 %v651, %v650
    %v654 = vadd.f32 %v652, %v650
    %657 = vst [vmem:[#allocation1] ss:$9 sm:$0xff] %v579
    %s658 = scalar_lea.vmem [#allocation1], 1
    %659 = vst [vmem:[%s658] ss:$9 sm:$0xff] %v580
    %v660 = vld [vmem:[#allocation1] sm:$0xff]
    %v661 = vld [vmem:[#allocation1 + $0x9] sm:$0xff]
    %v664 = vsel %vm92, %v660, 0.0
    %v665 = vsel %vm92, %v661, 0.0
    %v666 = vadd.f32 %v664, %v665
    %667 = vadd.xlane.f32.xlu0 %v666
    %v668 = vpop.xlane.xlu0 %667
    %v669 = vrot.slane %v668, 4
    %v670 = vadd.f32 %v668, %v669
    %v671 = vrot.slane %v670, 2
    %v672 = vadd.f32 %v670, %v671
    %v673 = vrot.slane %v672, 1
    %v674 = vadd.f32 %v672, %v673
    %s675 = vtos %v674
    %v676 = vstv %s675
    %v677 = vmul.f32 %v676, %v112
    %v678 = vmul.f32 %v579, %v579
    %v679 = vmul.f32 %v580, %v580
    %682 = vst [vmem:[#allocation1] ss:$9 sm:$0xff] %v678
    %s683 = scalar_lea.vmem [#allocation1], 1
    %684 = vst [vmem:[%s683] ss:$9 sm:$0xff] %v679
    %v685 = vld [vmem:[#allocation1] sm:$0xff]
    %v686 = vld [vmem:[#allocation1 + $0x9] sm:$0xff]
    %v689 = vsel %vm92, %v685, 0.0
    %v690 = vsel %vm92, %v686, 0.0
    %v691 = vadd.f32 %v689, %v690
    %692 = vadd.xlane.f32.xlu0 %v691
    %v693 = vpop.xlane.xlu0 %692
    %v694 = vrot.slane %v693, 4
    %v695 = vadd.f32 %v693, %v694
    %v696 = vrot.slane %v695, 2
    %v697 = vadd.f32 %v695, %v696
    %v698 = vrot.slane %v697, 1
    %v699 = vadd.f32 %v697, %v698
    %s700 = vtos %v699
    %v701 = vstv %s700
    %v702 = vmul.f32 %v701, %v112
    %v703 = vmul.f32 %v677, %v677
    %v704 = vsub.f32 %v702, %v703
    %s705 = sld [smem:[#allocation2 + $0x1f]]
    %v706 = vadd.f32 %v704, 1e-05
    %v707 = vrsqrt.pop %v706
    %v708 = vmul.f32 %v707, %v706
    %v709 = vmul.f32 %v708, %v707
    %v710 = vmul.f32 0.5, %v709
    %v711 = vsub.f32 1.5, %v710
    %v712 = vmul.f32 %v707, %v711
    %vm713 = vweird.f32 %v706
    %vm714 = vweird.f32 %v707
    %vm715 = vmor %vm713, %vm714
    %v716 = vsel %vm715, %v707, %v712
    %v717 = vstv %s705
    %v718 = vmul.f32 %v717, %v716
    %s719 = sld [smem:[#allocation2 + $0x22]]
    %v720 = vmul.f32 %v677, %v718
    %v721 = vstv %s719
    %v722 = vsub.f32 %v721, %v720
    %v723 = vmul.f32 %v579, %v718
    %v724 = vmul.f32 %v580, %v718
    %v725 = vadd.f32 %v723, %v722
    %v726 = vadd.f32 %v724, %v722
    %729 = vst [vmem:[#allocation1] ss:$9 sm:$0xff] %v581
    %s730 = scalar_lea.vmem [#allocation1], 1
    %731 = vst [vmem:[%s730] ss:$9 sm:$0xff] %v582
    %v732 = vld [vmem:[#allocation1] sm:$0xff]
    %v733 = vld [vmem:[#allocation1 + $0x9] sm:$0xff]
    %v736 = vsel %vm92, %v732, 0.0
    %v737 = vsel %vm92, %v733, 0.0
    %v738 = vadd.f32 %v736, %v737
    %739 = vadd.xlane.f32.xlu0 %v738
    %v740 = vpop.xlane.xlu0 %739
    %v741 = vrot.slane %v740, 4
    %v742 = vadd.f32 %v740, %v741
    %v743 = vrot.slane %v742, 2
    %v744 = vadd.f32 %v742, %v743
    %v745 = vrot.slane %v744, 1
    %v746 = vadd.f32 %v744, %v745
    %s747 = vtos %v746
    %v748 = vstv %s747
    %v749 = vmul.f32 %v748, %v112
    %v750 = vmul.f32 %v581, %v581
    %v751 = vmul.f32 %v582, %v582
    %754 = vst [vmem:[#allocation1] ss:$9 sm:$0xff] %v750
    %s755 = scalar_lea.vmem [#allocation1], 1
    %756 = vst [vmem:[%s755] ss:$9 sm:$0xff] %v751
    %v757 = vld [vmem:[#allocation1] sm:$0xff]
    %v758 = vld [vmem:[#allocation1 + $0x9] sm:$0xff]
    %v761 = vsel %vm92, %v757, 0.0
    %v762 = vsel %vm92, %v758, 0.0
    %v763 = vadd.f32 %v761, %v762
    %764 = vadd.xlane.f32.xlu0 %v763
    %v765 = vpop.xlane.xlu0 %764
    %v766 = vrot.slane %v765, 4
    %v767 = vadd.f32 %v765, %v766
    %v768 = vrot.slane %v767, 2
    %v769 = vadd.f32 %v767, %v768
    %v770 = vrot.slane %v769, 1
    %v771 = vadd.f32 %v769, %v770
    %s772 = vtos %v771
    %v773 = vstv %s772
    %v774 = vmul.f32 %v773, %v112
    %v775 = vmul.f32 %v749, %v749
    %v776 = vsub.f32 %v774, %v775
    %s777 = sld [smem:[#allocation2 + $0x20]]
    %v778 = vadd.f32 %v776, 1e-05
    %v779 = vrsqrt.pop %v778
    %v780 = vmul.f32 %v779, %v778
    %v781 = vmul.f32 %v780, %v779
    %v782 = vmul.f32 0.5, %v781
    %v783 = vsub.f32 1.5, %v782
    %v784 = vmul.f32 %v779, %v783
    %vm785 = vweird.f32 %v778
    %vm786 = vweird.f32 %v779
    %vm787 = vmor %vm785, %vm786
    %v788 = vsel %vm787, %v779, %v784
    %v789 = vstv %s777
    %v790 = vmul.f32 %v789, %v788
    %s791 = sld [smem:[#allocation2 + $0x23]]
    %v792 = vmul.f32 %v749, %v790
    %v793 = vstv %s791
    %v794 = vsub.f32 %v793, %v792
    %v795 = vmul.f32 %v581, %v790
    %v796 = vmul.f32 %v582, %v790
    %v797 = vadd.f32 %v795, %v794
    %v798 = vadd.f32 %v796, %v794
    %v799 = vlaneseq
    %vm800 = vcmp.ge.s32.totalorder %v799, 0
    %vm801 = vcmp.lt.s32.totalorder %v799, 256
    %vm802 = vmand %vm800, %vm801
    %803 = vst.msk [vmem:[%s2] ss:$4 sm:$0x3] %vm802, %v653
    %s804 = scalar_lea.vmem %s2, 8
    %805 = vst.msk [vmem:[%s804] ss:$4 sm:$0x3] %vm802, %v654
    %s806 = scalar_lea.vmem %s2, 1
    %807 = vst.msk [vmem:[%s806] ss:$4 sm:$0x3] %vm802, %v725
    %s808 = scalar_lea.vmem %s2, 9
    %809 = vst.msk [vmem:[%s808] ss:$4 sm:$0x3] %vm802, %v726
    %s810 = scalar_lea.vmem %s2, 2
    %811 = vst.msk [vmem:[%s810] ss:$4 sm:$0x3] %vm802, %v797
    %s812 = scalar_lea.vmem %s2, 10
    %813 = vst.msk [vmem:[%s812] ss:$4 sm:$0x3] %vm802, %v798
    // Predicated region
    $region14: #{advanced_model_forward.1} parent=1 // pred_check
      _
    $region15: #{advanced_model_forward.1} parent=1 // pred_check_branch
      %815 = sbr.rel (0) target = $region17
    $region16: #{advanced_model_forward.1} parent=1 // pred_region
      _
    $region17: #{advanced_model_forward.1} parent=1 // pred_fallthru
      _
    // Predicated region
    $region18: #{advanced_model_forward.1} parent=1 // pred_check
      _
    $region19: #{advanced_model_forward.1} parent=1 // pred_check_branch
      %817 = sbr.rel (0) target = $region21
    $region20: #{advanced_model_forward.1} parent=1 // pred_region
      _
    $region21: #{advanced_model_forward.1} parent=1 // pred_fallthru
      _
    %818 = vsyncpa [#allocation3], 1

</llo_original>
